<compile_context>
chip_gen: v5e
topology: v5e:2x2
jax: 0.10.0
libtpu: 0.0.40
codegen_flags: <defaults>
</compile_context>

<pallas_src>
import functools
import math

import jax
import jax.numpy as jnp
from jax import lax
from jax.experimental import pallas as pl
from jax.experimental.pallas import tpu as pltpu

_EPS = 1e-5          # PyTorch BatchNorm default
_LANES = 128
_SUBLANES = 8


def _vmem_limit_and_budget():
    """Generation-aware VMEM limit + tiling budget (bytes)."""
    try:
        cap = int(pltpu.get_tpu_info().vmem_capacity_bytes)
    except Exception:
        cap = 64 * 1024 * 1024            # conservative: v7x per-TC size
    # v5e/v6e (128 MiB) -> 96 MiB limit; v7x (64 MiB) -> 48 MiB limit.
    limit = max(32 * 1024 * 1024, min((cap * 3) // 4, 112 * 1024 * 1024))
    budget = int(limit * 0.8)
    return limit, budget


def _fused_bn_kernel(inv_n_ref, gamma_ref, beta_ref, x_ref, o_ref, *scratch,
                     n_row_tiles, row_tile, eps):
    """One (layer, channel) group per step on grid axis 0; row tiles on axis 1.

    inv_n/gamma/beta: (G,) SMEM scalars.
    x_ref: (row_tile, 128) VMEM tile of the current group (zero-padded tail).
    o_ref: (Rg, 128) VMEM group-resident output block.
    scratch (only when n_row_tiles > 1): two (8, 128) fp32 partial-sum buffers.
    """
    g = pl.program_id(0)
    t = pl.program_id(1)

    x = x_ref[...].astype(jnp.float32)                       # (tR, 128)
    # Per-sublane/lane partial sums: pure VPU vreg adds.  Padded slots are
    # zeros, so no masking is needed; the true count enters through inv_n.
    psum = x.reshape(-1, _SUBLANES, _LANES).sum(axis=0)       # (8, 128)
    psq = (x * x).reshape(-1, _SUBLANES, _LANES).sum(axis=0)  # (8, 128)

    def _affine(tot, tot_sq):
        inv_n = inv_n_ref[g]
        mean = tot * inv_n
        ex2 = tot_sq * inv_n
        var = jnp.maximum(ex2 - mean * mean, 0.0)             # cancellation guard
        inv_std = lax.rsqrt(var + eps)
        scale = gamma_ref[g] * inv_std
        shift = beta_ref[g] - mean * scale
        return scale, shift

    if n_row_tiles == 1:
        # Whole group lives in registers: no scratch, no stash, no o_ref
        # re-read; a single deferred XLU reduce.
        tot = jnp.sum(psum, axis=(0, 1), keepdims=True)       # (1, 1)
        tot_sq = jnp.sum(psq, axis=(0, 1), keepdims=True)
        scale, shift = _affine(tot, tot_sq)
        o_ref[...] = (x * scale + shift).astype(o_ref.dtype)
    else:
        sum_ref, sq_ref = scratch

        @pl.when(t == 0)
        def _init():
            sum_ref[...] = jnp.zeros_like(sum_ref)
            sq_ref[...] = jnp.zeros_like(sq_ref)

        sum_ref[...] += psum
        sq_ref[...] += psq

        # Stash the already-live tile into the group-resident output block so
        # x is read from HBM exactly once.
        start = pl.multiple_of(t * row_tile, row_tile)
        o_ref[pl.ds(start, row_tile), :] = x.astype(o_ref.dtype)

        @pl.when(t == n_row_tiles - 1)
        def _finalize():
            tot = jnp.sum(sum_ref[...], axis=(0, 1), keepdims=True)
            tot_sq = jnp.sum(sq_ref[...], axis=(0, 1), keepdims=True)
            scale, shift = _affine(tot, tot_sq)
            o_ref[...] = (o_ref[...].astype(jnp.float32) * scale
                          + shift).astype(o_ref.dtype)


def _ref_bn(x, gamma, beta, eps=_EPS):
    """Pure-JAX reference (batch statistics, biased variance)."""
    axes = (0,) + tuple(range(2, x.ndim))
    mean = jnp.mean(x, axis=axes, keepdims=True)
    var = jnp.mean((x - mean) ** 2, axis=axes, keepdims=True)
    shape = [1, x.shape[1]] + [1] * (x.ndim - 2)
    return (x - mean) / jnp.sqrt(var + eps) * gamma.reshape(shape) + beta.reshape(shape)


def fused_batchnorm_batch_stats(xs, gammas, betas, *, eps=_EPS):
    """BatchNorm{1,2,3}d with batch statistics on several tensors, ONE launch.

    xs: list of (N, C, *spatial) arrays; gammas/betas: matching (C,) arrays.
    Returns the list of normalized arrays (original shapes / dtypes).
    """
    metas = []
    for x in xs:
        N, C = int(x.shape[0]), int(x.shape[1])
        S = math.prod(tuple(int(s) for s in x.shape[2:])) if x.ndim > 2 else 1
        metas.append((N, C, S))

    # Common lane-dense layout: each (layer, channel) group is a zero-padded
    # (Rg, 128) slab; Rg shared across layers (small waste for mismatched
    # sizes, negligible here) so one uniform grid covers every group.
    max_elems = max(N * S for (N, _, S) in metas)
    rows = -(-max_elems // _LANES)
    Rg = max(_SUBLANES, -(-rows // _SUBLANES) * _SUBLANES)
    G = sum(C for (_, C, _) in metas)

    pack_dtype = jnp.result_type(*[x.dtype for x in xs])
    itemsize = jnp.dtype(pack_dtype).itemsize
    group_bytes = Rg * _LANES * itemsize
    vmem_limit, vmem_budget = _vmem_limit_and_budget()

    # Budget-driven tiling: prefer T=1 (no stash); otherwise row-tile with a
    # group-resident output block; beyond the budget fall back to XLA.
    if 4 * group_bytes <= vmem_budget:                 # in + out, double-buffered
        tR = Rg
    else:
        tR = 0
        for cand in range(Rg - _SUBLANES, 0, -_SUBLANES):
            if Rg % cand == 0 and (2 * group_bytes
                                   + 2 * cand * _LANES * itemsize) <= vmem_budget:
                tR = cand
                break
        if tR == 0:
            # TODO(synk): very large per-channel slabs need a two-pass
            # streaming variant (stats kernel + parallel normalize kernel);
            # use plain XLA for those instead of a spilling resident design.
            return [_ref_bn(x, g, b, eps) for x, g, b in zip(xs, gammas, betas)]
    T = Rg // tR

    # Pack: per channel, flatten (N, *spatial), zero-pad to Rg*128 lanes.
    slabs, inv_ns = [], []
    for x, (N, C, S) in zip(xs, metas):
        flat = jnp.transpose(x.reshape(N, C, S), (1, 0, 2)).reshape(C, N * S)
        flat = jnp.pad(flat, ((0, 0), (0, Rg * _LANES - N * S)))
        slabs.append(flat.reshape(C, Rg, _LANES).astype(pack_dtype))
        inv_ns.append(jnp.full((C,), 1.0 / (N * S), jnp.float32))
    x_packed = jnp.concatenate(slabs, axis=0)                    # (G, Rg, 128)
    inv_n = jnp.concatenate(inv_ns)
    gamma = jnp.concatenate([g.astype(jnp.float32) for g in gammas])
    beta = jnp.concatenate([b.astype(jnp.float32) for b in betas])

    kernel = functools.partial(_fused_bn_kernel,
                               n_row_tiles=T, row_tile=tR, eps=float(eps))
    scratch = ([] if T == 1
               else [pltpu.VMEM((_SUBLANES, _LANES), jnp.float32)] * 2)

    out_packed = pl.pallas_call(
        kernel,
        out_shape=jax.ShapeDtypeStruct((G, Rg, _LANES), pack_dtype),
        grid=(G, T),
        in_specs=[
            pl.BlockSpec(memory_space=pltpu.MemorySpace.SMEM),   # 1/n per group
            pl.BlockSpec(memory_space=pltpu.MemorySpace.SMEM),   # gamma
            pl.BlockSpec(memory_space=pltpu.MemorySpace.SMEM),   # beta
            pl.BlockSpec((None, tR, _LANES), lambda g, t: (g, t, 0)),
        ],
        # Group-resident output block (constant across the row-tile axis).
        out_specs=pl.BlockSpec((None, Rg, _LANES), lambda g, t: (g, 0, 0)),
        scratch_shapes=scratch,
        compiler_params=pltpu.CompilerParams(
            # Group axis is independent -> megacore sharding; row-tile axis is
            # a reduction with a resident output block -> "arbitrary".
            # TODO(synk): on v7x, pltpu.CORE_PARALLEL on axis 0 may be needed
            # to actually split the groups across the two TensorCores.
            dimension_semantics=("parallel", "arbitrary"),
            vmem_limit_bytes=vmem_limit,
        ),
    )(inv_n, gamma, beta, x_packed)

    # Unpack: drop padding, restore (N, C, *spatial) layouts / dtypes.
    outs, off = [], 0
    for x, (N, C, S) in zip(xs, metas):
        blk = out_packed[off:off + C].reshape(C, Rg * _LANES)[:, :N * S]
        y = jnp.transpose(blk.reshape(C, N, S), (1, 0, 2))
        outs.append(y.reshape(x.shape).astype(x.dtype))
        off += C
    return outs


class ModelWithBNRunningStatsOff:
    """JAX/Pallas port of Model_with_BN_running_stats_off."""

    def __init__(self):
        C = 2
        # PyTorch BatchNorm deterministic default init: weight=1, bias=0.
        self.w1 = jnp.ones((C,), jnp.float32)
        self.b1 = jnp.zeros((C,), jnp.float32)
        self.w2 = jnp.ones((C,), jnp.float32)
        self.b2 = jnp.zeros((C,), jnp.float32)
        self.w3 = jnp.ones((C,), jnp.float32)
        self.b3 = jnp.zeros((C,), jnp.float32)

    def norm1(self, x):  # BatchNorm1d, x: (N, C, L)
        return fused_batchnorm_batch_stats([x], [self.w1], [self.b1])[0]

    def norm2(self, x):  # BatchNorm2d, x: (N, C, H, W)
        return fused_batchnorm_batch_stats([x], [self.w2], [self.b2])[0]

    def norm3(self, x):  # BatchNorm3d, x: (N, C, D, H, W)
        return fused_batchnorm_batch_stats([x], [self.w3], [self.b3])[0]

    def forward(self, x1, x2, x3):
        # Original torch forward is `pass`; all three norms are fused into a
        # single pallas_call here.
        return tuple(fused_batchnorm_batch_stats(
            [x1, x2, x3],
            [self.w1, self.w2, self.w3],
            [self.b1, self.b2, self.b3]))


if __name__ == "__main__":
    key = jax.random.PRNGKey(0)
    k1, k2, k3 = jax.random.split(key, 3)

    x1 = jax.random.normal(k1, (2, 2, 8), dtype=jnp.float32)        # BatchNorm1d input
    x2 = jax.random.normal(k2, (2, 2, 16, 16), dtype=jnp.float32)   # BatchNorm2d input
    x3 = jax.random.normal(k3, (2, 2, 4, 8, 8), dtype=jnp.float32)  # BatchNorm3d input

    model = ModelWithBNRunningStatsOff()
    fwd = jax.jit(model.forward)          # lets XLA fold the pack/unpack plumbing
    y1, y2, y3 = fwd(x1, x2, x3)
    jax.block_until_ready((y1, y2, y3))

    # Numerical check against a pure-JAX reference.
    for y, x, w, b in ((y1, x1, model.w1, model.b1),
                       (y2, x2, model.w2, model.b2),
                       (y3, x3, model.w3, model.b3)):
        ref = _ref_bn(x, w, b)
        assert jnp.max(jnp.abs(y - ref)) < 1e-4, "mismatch vs reference"

    print("KERNEL_OK")
</pallas_src>

<mosaic_0001>
module attributes {stable_mosaic.version = 11 : i64} {
  func.func @_fused_bn_kernel(%arg0: i32, %arg1: i32, %arg2: memref<6xf32, #tpu.memory_space<smem>>, %arg3: memref<6xf32, #tpu.memory_space<smem>>, %arg4: memref<6xf32, #tpu.memory_space<smem>>, %arg5: memref<1x8x128xf32, #tpu.memory_space<vmem>>, %arg6: memref<1x8x128xf32, #tpu.memory_space<vmem>>) attributes {dimension_semantics = [#tpu.dimension_semantics<parallel>, #tpu.dimension_semantics<arbitrary>], iteration_bounds = array<i64: 6, 1>, scalar_prefetch = 0 : i64, scratch_operands = 0 : i64, tpu.core_type = #tpu.core_type<tc>, window_params = [{transform_indices = @transform_0, window_bounds = array<i64: 6>}, {transform_indices = @transform_1, window_bounds = array<i64: 6>}, {transform_indices = @transform_2, window_bounds = array<i64: 6>}, {transform_indices = @transform_3, window_bounds = array<i64: 1, 8, 128>}, {transform_indices = @transform_4, window_bounds = array<i64: 1, 8, 128>}]} {
    %c0 = arith.constant 0 : index
    %c0_0 = arith.constant 0 : index
    %c0_1 = arith.constant 0 : index
    %0 = vector.load %arg5[%c0, %c0_0, %c0_1] : memref<1x8x128xf32, #tpu.memory_space<vmem>>, vector<1x8x128xf32>
    %1 = vector.shape_cast %0 : vector<1x8x128xf32> to vector<8x128xf32>
    %2 = vector.shape_cast %1 : vector<8x128xf32> to vector<1x8x128xf32>
    %cst = arith.constant dense<0.000000e+00> : vector<8x128xf32>
    %3 = vector.multi_reduction <add>, %2, %cst [0] : vector<1x8x128xf32> to vector<8x128xf32>
    %4 = arith.mulf %1, %1 : vector<8x128xf32>
    %5 = vector.shape_cast %4 : vector<8x128xf32> to vector<1x8x128xf32>
    %cst_2 = arith.constant dense<0.000000e+00> : vector<8x128xf32>
    %6 = vector.multi_reduction <add>, %5, %cst_2 [0] : vector<1x8x128xf32> to vector<8x128xf32>
    %7 = vector.shape_cast %3 : vector<8x128xf32> to vector<1x8x128xf32>
    %cst_3 = arith.constant dense<0.000000e+00> : vector<1xf32>
    %8 = vector.multi_reduction <add>, %7, %cst_3 [1, 2] : vector<1x8x128xf32> to vector<1xf32>
    %9 = vector.shape_cast %8 : vector<1xf32> to vector<1x1x1xf32>
    %10 = vector.extract %9[0, 0, 0] : f32 from vector<1x1x1xf32>
    %11 = vector.broadcast %10 : f32 to vector<1x1xf32>
    %12 = vector.shape_cast %6 : vector<8x128xf32> to vector<1x8x128xf32>
    %cst_4 = arith.constant dense<0.000000e+00> : vector<1xf32>
    %13 = vector.multi_reduction <add>, %12, %cst_4 [1, 2] : vector<1x8x128xf32> to vector<1xf32>
    %14 = vector.shape_cast %13 : vector<1xf32> to vector<1x1x1xf32>
    %15 = vector.extract %14[0, 0, 0] : f32 from vector<1x1x1xf32>
    %16 = vector.broadcast %15 : f32 to vector<1x1xf32>
    %17 = arith.index_cast %arg0 : i32 to index
    %18 = memref.load %arg2[%17] : memref<6xf32, #tpu.memory_space<smem>>
    %19 = vector.broadcast %18 : f32 to vector<1x1xf32>
    %20 = arith.mulf %11, %19 : vector<1x1xf32>
    %21 = vector.broadcast %18 : f32 to vector<1x1xf32>
    %22 = arith.mulf %16, %21 : vector<1x1xf32>
    %23 = arith.mulf %20, %20 : vector<1x1xf32>
    %24 = arith.subf %22, %23 : vector<1x1xf32>
    %cst_5 = arith.constant 0.000000e+00 : f32
    %25 = vector.broadcast %cst_5 : f32 to vector<1x1xf32>
    %26 = arith.maximumf %24, %25 : vector<1x1xf32>
    %cst_6 = arith.constant 9.99999974E-6 : f32
    %27 = vector.broadcast %cst_6 : f32 to vector<1x1xf32>
    %28 = arith.addf %26, %27 : vector<1x1xf32>
    %29 = math.rsqrt %28 : vector<1x1xf32>
    %30 = arith.index_cast %arg0 : i32 to index
    %31 = memref.load %arg3[%30] : memref<6xf32, #tpu.memory_space<smem>>
    %32 = vector.broadcast %31 : f32 to vector<1x1xf32>
    %33 = arith.mulf %32, %29 : vector<1x1xf32>
    %34 = arith.index_cast %arg0 : i32 to index
    %35 = memref.load %arg4[%34] : memref<6xf32, #tpu.memory_space<smem>>
    %36 = arith.mulf %20, %33 : vector<1x1xf32>
    %37 = vector.broadcast %35 : f32 to vector<1x1xf32>
    %38 = arith.subf %37, %36 : vector<1x1xf32>
    %39 = vector.broadcast %33 : vector<1x1xf32> to vector<8x128xf32>
    %40 = arith.mulf %1, %39 : vector<8x128xf32>
    %41 = vector.broadcast %38 : vector<1x1xf32> to vector<8x128xf32>
    %42 = arith.addf %40, %41 : vector<8x128xf32>
    %c0_7 = arith.constant 0 : index
    %c0_8 = arith.constant 0 : index
    %c0_9 = arith.constant 0 : index
    %43 = vector.load %arg6[%c0_7, %c0_8, %c0_9] : memref<1x8x128xf32, #tpu.memory_space<vmem>>, vector<1x8x128xf32>
    %44 = vector.shape_cast %43 : vector<1x8x128xf32> to vector<8x128xf32>
    %45 = vector.shape_cast %42 : vector<8x128xf32> to vector<1x8x128xf32>
    tpu.vector_store %arg6[%c0_7, %c0_8, %c0_9], %45 {strides = array<i32>} : memref<1x8x128xf32, #tpu.memory_space<vmem>>, vector<1x8x128xf32>,
    return
  }
  func.func @transform_0(%arg0: i32, %arg1: i32) -> i32 {
    %c0_i32 = arith.constant 0 : i32
    %c0_i32_0 = arith.constant 0 : i32
    return %c0_i32 : i32
  }
  func.func @transform_1(%arg0: i32, %arg1: i32) -> i32 {
    %c0_i32 = arith.constant 0 : i32
    %c0_i32_0 = arith.constant 0 : i32
    return %c0_i32 : i32
  }
  func.func @transform_2(%arg0: i32, %arg1: i32) -> i32 {
    %c0_i32 = arith.constant 0 : i32
    %c0_i32_0 = arith.constant 0 : i32
    return %c0_i32 : i32
  }
  func.func @transform_3(%arg0: i32, %arg1: i32) -> (i32, i32, i32) {
    %c0_i32 = arith.constant 0 : i32
    %c0_i32_0 = arith.constant 0 : i32
    return %arg0, %arg1, %c0_i32 : i32, i32, i32
  }
  func.func @transform_4(%arg0: i32, %arg1: i32) -> (i32, i32, i32) {
    %c0_i32 = arith.constant 0 : i32
    %c0_i32_0 = arith.constant 0 : i32
    %c0_i32_1 = arith.constant 0 : i32
    return %arg0, %c0_i32, %c0_i32_0 : i32, i32, i32
  }
}

</mosaic_0001>

<llo_original>
// kernel: forward.1
$region0: #{forward.1}
  #allocation0 [shape = 'u32[]', space=smem, size = 0x4, offset = 0x4, fixed_abs, tag = 'smem constant byte address 0x4 - core index']
  #allocation1 [shape = 'u32[72,128]{1,0:T(1,128)}', space=vmem, size = 0x9000, scoped, tag = 'internal scratch']
  %s0 = inlined_call_operand.vmem [shape: f32[6], index: 0, kind: input, shape index: {}]
  %s1 = inlined_call_operand.vmem [shape: f32[6], index: 1, kind: input, shape index: {}]
  %s2 = inlined_call_operand.vmem [shape: f32[6], index: 2, kind: input, shape index: {}]
  %s3 = inlined_call_operand.vmem [shape: f32[6,8,128], index: 3, kind: input, shape index: {}]
  %s4 = inlined_call_operand.vmem [shape: f32[6,8,128], index: 4, kind: output, shape index: {}]
  %s5 = sld [smem:[#allocation0]]
  $region61: #{forward.1} parent=0
    _
  %s7 = ssub.s32 1, %s5
  %s8 = scalar_select 0, %s7, %s5
  $region1: #{forward.1} parent=0
    #allocation2 [shape = 'u8[512]{0}', space=smem, size = 0x200, scoped, tag = 'input window, operand 0, single buffered']
    #allocation3 [shape = 's32[2]{0}', space=sflag, size = 0x8, scoped, tag = 'scoped memory for forward.1']
    #allocation4 [shape = 'u8[512]{0}', space=smem, size = 0x200, scoped, tag = 'input window, operand 1, single buffered']
    #allocation5 [shape = 's32[1]{0}', space=sflag, size = 0x4, scoped, tag = 'scoped memory for forward.1']
    #allocation6 [shape = 'u8[512]{0}', space=smem, size = 0x200, scoped, tag = 'input window, operand 2, single buffered']
    %9 = vsyncpa [#allocation3], 0
    %10 = vsyncpa [#allocation5], 0
    loop: start=0, step=1, limit=8
    $region2: #{forward.1} parent=1 // loop_pre_header
      _
    $region3: #{forward.1} parent=1 // loop_header
      %s12 = sphi 0, %s16
      %p13 = scmp.ge.s32.totalorder %s12, 8
      %s19 = sphi 0, %s31
      %s20 = sphi 0, %s27
      %s21 = sphi 0, %s19
      %s22 = sphi 0, %s20
      %s23 = sphi 0, %s21
      %s24 = sphi 0, %s22
      %s32 = sphi 0, %s32
      %s34 = sphi 0, %s32
      %s35 = sphi 0, %s34
      %s49 = sphi 0, %s35
      %s53 = sphi 0, %s53
      %s55 = sphi 0, %s53
      %s56 = sphi 0, %s55
      %s70 = sphi 0, %s56
      %s74 = sphi 0, %s74
      %s76 = sphi 0, %s74
      %s77 = sphi 0, %s76
      %s91 = sphi 0, %s77
      %s99 = sphi 0, %s101
      %s102 = sphi 0, %s99
      %s103 = sphi 0, %s102
      %s119 = sphi 0, %s103
      %s125 = sphi 0, %s127
      %s128 = sphi 0, %s125
      %s129 = sphi 0, %s128
      %s145 = sphi 0, %s129
    $region4: #{forward.1} parent=1 // loop_header_branch
      %15 = sbr.rel (%p13) target = $region8
    $region5: #{forward.1} parent=1 // loop_body
      %s17 = ssub.s32 %s12, 1
      %s18 = ssub.s32 %s12, 2
      %s25 = sadd.s32 1, %s20
      %p26 = scmp.ge.s32.totalorder %s25, 1
      %s27 = scalar_select %p26, 0, %s25
      %s28 = sadd.s32 1, %s19
      %s29 = scalar_select %p26, %s28, %s19
      %p30 = scmp.ge.s32.totalorder %s29, 6
      %s31 = scalar_select %p30, 0, %s29
      %s33 = sadd.s32 %s32, 1
      %p36 = scmp.eq.s32.totalorder %s12, 5
      %p37 = scmp.ne.s32.totalorder %s32, %s34
      %p38 = scmp.eq.s32.totalorder %s12, 0
      %p39 = por %p37, %p38
      %p40 = scmp.ne.s32.totalorder %s32, %s34
      %p41 = scmp.eq.s32.totalorder %s17, 5
      %p42 = por %p40, %p41
      %p43 = scmp.ne.s32.totalorder %s34, %s35
      %p44 = scmp.eq.s32.totalorder %s17, 0
      %p45 = por %p43, %p44
      %p46 = scmp.ne.s32.totalorder %s34, %s35
      %p47 = scmp.eq.s32.totalorder %s18, 5
      %p48 = por %p46, %p47
      %p50 = scmp.ne.s32.totalorder %s35, %s49
      %p51 = scmp.eq.s32.totalorder %s18, 0
      %p52 = por %p50, %p51
      %s54 = sadd.s32 %s53, 1
      %p57 = scmp.eq.s32.totalorder %s12, 5
      %p58 = scmp.ne.s32.totalorder %s53, %s55
      %p59 = scmp.eq.s32.totalorder %s12, 0
      %p60 = por %p58, %p59
      %p61 = scmp.ne.s32.totalorder %s53, %s55
      %p62 = scmp.eq.s32.totalorder %s17, 5
      %p63 = por %p61, %p62
      %p64 = scmp.ne.s32.totalorder %s55, %s56
      %p65 = scmp.eq.s32.totalorder %s17, 0
      %p66 = por %p64, %p65
      %p67 = scmp.ne.s32.totalorder %s55, %s56
      %p68 = scmp.eq.s32.totalorder %s18, 5
      %p69 = por %p67, %p68
      %p71 = scmp.ne.s32.totalorder %s56, %s70
      %p72 = scmp.eq.s32.totalorder %s18, 0
      %p73 = por %p71, %p72
      %s75 = sadd.s32 %s74, 1
      %p78 = scmp.eq.s32.totalorder %s12, 5
      %p79 = scmp.ne.s32.totalorder %s74, %s76
      %p80 = scmp.eq.s32.totalorder %s12, 0
      %p81 = por %p79, %p80
      %p82 = scmp.ne.s32.totalorder %s74, %s76
      %p83 = scmp.eq.s32.totalorder %s17, 5
      %p84 = por %p82, %p83
      %p85 = scmp.ne.s32.totalorder %s76, %s77
      %p86 = scmp.eq.s32.totalorder %s17, 0
      %p87 = por %p85, %p86
      %p88 = scmp.ne.s32.totalorder %s76, %s77
      %p89 = scmp.eq.s32.totalorder %s18, 5
      %p90 = por %p88, %p89
      %p92 = scmp.ne.s32.totalorder %s77, %s91
      %p93 = scmp.eq.s32.totalorder %s18, 0
      %p94 = por %p92, %p93
      %s95 = ssub.s32 %s19, %s31
      %s96 = ssub.s32 %s20, %s27
      %s97 = sor.u32 %s95, %s96
      %p98 = scmp.eq.s32.totalorder %s97, 0
      %s100 = sadd.s32 %s99, 1
      %s101 = scalar_select %p98, %s99, %s100
      %p104 = pneg %p98
      %p105 = scmp.eq.s32.totalorder %s12, 5
      %p106 = por %p104, %p105
      %p107 = scmp.ne.s32.totalorder %s99, %s102
      %p108 = scmp.eq.s32.totalorder %s12, 0
      %p109 = por %p107, %p108
      %p110 = scmp.ne.s32.totalorder %s99, %s102
      %p111 = scmp.eq.s32.totalorder %s17, 5
      %p112 = por %p110, %p111
      %p113 = scmp.ne.s32.totalorder %s102, %s103
      %p114 = scmp.eq.s32.totalorder %s17, 0
      %p115 = por %p113, %p114
      %p116 = scmp.ne.s32.totalorder %s102, %s103
      %p117 = scmp.eq.s32.totalorder %s18, 5
      %p118 = por %p116, %p117
      %p120 = scmp.ne.s32.totalorder %s103, %s119
      %p121 = scmp.eq.s32.totalorder %s18, 0
      %p122 = por %p120, %p121
      %s123 = ssub.s32 %s19, %s31
      %p124 = scmp.eq.s32.totalorder %s123, 0
      %s126 = sadd.s32 %s125, 1
      %s127 = scalar_select %p124, %s125, %s126
      %p130 = pneg %p124
      %p131 = scmp.eq.s32.totalorder %s12, 5
      %p132 = por %p130, %p131
      %p133 = scmp.ne.s32.totalorder %s125, %s128
      %p134 = scmp.eq.s32.totalorder %s12, 0
      %p135 = por %p133, %p134
      %p136 = scmp.ne.s32.totalorder %s125, %s128
      %p137 = scmp.eq.s32.totalorder %s17, 5
      %p138 = por %p136, %p137
      %p139 = scmp.ne.s32.totalorder %s128, %s129
      %p140 = scmp.eq.s32.totalorder %s17, 0
      %p141 = por %p139, %p140
      %p142 = scmp.ne.s32.totalorder %s128, %s129
      %p143 = scmp.eq.s32.totalorder %s18, 5
      %p144 = por %p142, %p143
      %p146 = scmp.ne.s32.totalorder %s129, %s145
      %p147 = scmp.eq.s32.totalorder %s18, 0
      %p148 = por %p146, %p147
      %p149 = scmp.le.s32.totalorder 1, %s12
      %p150 = scmp.lt.s32.totalorder %s12, 7
      %p151 = pnand %p149, %p150
      %p152 = pneg %p151
      // Predicated region
      $region9: #{forward.1} parent=5 // pred_check
        _
      $region10: #{forward.1} parent=5 // pred_check_branch
        %154 = sbr.rel (%p151) target = $region12
      $region11: #{forward.1} parent=5 // pred_region
        %s155 = ssub.s32 %s12, 1
        // Predicated region
        $region13: #{forward.1} parent=11 // pred_check
          %p156 = pneg %p45
        $region14: #{forward.1} parent=11 // pred_check_branch
          %158 = sbr.rel (%p156) target = $region16
        $region15: #{forward.1} parent=11 // pred_region
          %160 = vsyncadd [#allocation3], 0
          %s162 = sshll.u32 %s0, 4
          %s163 = int_to_ptr.vmem [resolvable:$true] %s162
          %165 = dma.vmem_to_smem %s163, 16, [#allocation2], [#allocation3]
        $region16: #{forward.1} parent=11 // pred_fallthru
          _
        // Predicated region
        $region17: #{forward.1} parent=11 // pred_check
          %p166 = pneg %p66
        $region18: #{forward.1} parent=11 // pred_check_branch
          %168 = sbr.rel (%p166) target = $region20
        $region19: #{forward.1} parent=11 // pred_region
          %170 = vsyncadd [#allocation5], 0
          %s172 = sshll.u32 %s1, 4
          %s173 = int_to_ptr.vmem [resolvable:$true] %s172
          %175 = dma.vmem_to_smem %s173, 16, [#allocation4], [#allocation5]
        $region20: #{forward.1} parent=11 // pred_fallthru
          _
        // Predicated region
        $region21: #{forward.1} parent=11 // pred_check
          %p176 = pneg %p87
        $region22: #{forward.1} parent=11 // pred_check_branch
          %178 = sbr.rel (%p176) target = $region24
        $region23: #{forward.1} parent=11 // pred_region
          %180 = vsyncadd [#allocation5], 0
          %s182 = sshll.u32 %s2, 4
          %s183 = int_to_ptr.vmem [resolvable:$true] %s182
          %185 = dma.vmem_to_smem %s183, 16, [#allocation6], [#allocation5]
        $region24: #{forward.1} parent=11 // pred_fallthru
          _
      $region12: #{forward.1} parent=5 // pred_fallthru
        _
      %p186 = scmp.lt.s32.totalorder %s12, 6
      // Predicated region
      $region25: #{forward.1} parent=5 // pred_check
        %p187 = pneg %p186
      $region26: #{forward.1} parent=5 // pred_check_branch
        %189 = sbr.rel (%p187) target = $region28
      $region27: #{forward.1} parent=5 // pred_region
        // Predicated region
        $region29: #{forward.1} parent=27 // pred_check
          %p190 = pneg %p109
        $region30: #{forward.1} parent=27 // pred_check_branch
          %192 = sbr.rel (%p190) target = $region32
        $region31: #{forward.1} parent=27 // pred_region
          %p193 = scmp.lt.s32.totalorder %s19, 5
          %s194 = scalar_select %p193, %s19, 5
          %p195 = scmp.lt.s32.totalorder %s20, 0
          %s196 = scalar_select %p195, %s20, 0
          %s197 = sadd.s32 %s196, %s194
          %s198 = smul.addr %s197, 8
          %s199 = scalar_lea.vmem %s3, %s198
        $region32: #{forward.1} parent=27 // pred_fallthru
          _
      $region28: #{forward.1} parent=5 // pred_fallthru
        _
      %p200 = scmp.le.s32.totalorder 1, %s12
      %p201 = scmp.lt.s32.totalorder %s12, 7
      %p202 = pnand %p200, %p201
      %p203 = pneg %p202
      // Predicated region
      $region33: #{forward.1} parent=5 // pred_check
        _
      $region34: #{forward.1} parent=5 // pred_check_branch
        %205 = sbr.rel (%p202) target = $region36
      $region35: #{forward.1} parent=5 // pred_region
        %s206 = ssub.s32 %s12, 1
        // Predicated region
        $region37: #{forward.1} parent=35 // pred_check
          %p207 = pneg %p45
        $region38: #{forward.1} parent=35 // pred_check_branch
          %209 = sbr.rel (%p207) target = $region40
        $region39: #{forward.1} parent=35 // pred_region
          %211 = dma.done [#allocation3], 16
        $region40: #{forward.1} parent=35 // pred_fallthru
          _
        // Predicated region
        $region41: #{forward.1} parent=35 // pred_check
          %p212 = pneg %p66
        $region42: #{forward.1} parent=35 // pred_check_branch
          %214 = sbr.rel (%p212) target = $region44
        $region43: #{forward.1} parent=35 // pred_region
          %216 = dma.done [#allocation5], 16
        $region44: #{forward.1} parent=35 // pred_fallthru
          _
        // Predicated region
        $region45: #{forward.1} parent=35 // pred_check
          %p217 = pneg %p87
        $region46: #{forward.1} parent=35 // pred_check_branch
          %219 = sbr.rel (%p217) target = $region48
        $region47: #{forward.1} parent=35 // pred_region
          %221 = dma.done [#allocation5], 16
        $region48: #{forward.1} parent=35 // pred_fallthru
          _
        %222 = sfence
        %p223 = pneg %p45
        %p224 = pneg %p42
        %p225 = pneg %p66
        %p226 = pneg %p63
        %p227 = pneg %p87
        %p228 = pneg %p84
        %p229 = scmp.lt.s32.totalorder %s21, 5
        %s230 = scalar_select %p229, %s21, 5
        %p231 = scmp.lt.s32.totalorder %s22, 0
        %s232 = scalar_select %p231, %s22, 0
        %s233 = sadd.s32 %s232, %s230
        %s234 = smul.addr %s233, 8
        %s235 = scalar_lea.vmem %s3, %s234
        %p236 = pneg %p115
        %p237 = pneg %p112
        %p238 = pneg %p141
        %p239 = pneg %p138
        %p240 = scmp.lt.s32.totalorder %s21, 5
        %s241 = scalar_select %p240, %s21, 5
        %s242 = smul.addr %s241, 8
        %s243 = scalar_lea.vmem %s4, %s242
        %p244 = scmp.lt.s32.totalorder %s21, 5
        %s245 = scalar_select %p244, %s21, 5
        %p246 = scmp.lt.s32.totalorder %s22, 0
        %s247 = scalar_select %p246, %s22, 0
        %s248 = sadd.s32 %s247, %s245
        %s249 = smul.addr %s248, 8
        %s250 = scalar_lea.vmem %s3, %s249
        %p251 = scmp.lt.s32.totalorder %s21, 5
        %s252 = scalar_select %p251, %s21, 5
        %s253 = smul.addr %s252, 8
        %s254 = scalar_lea.vmem %s4, %s253
        %v255 = vld [vmem:[%s250] sm:$0xff]
        %v256 = vadd.f32 %v255, 0.0
        %v257 = vmul.f32 %v255, %v255
        %v258 = vadd.f32 %v257, 0.0
        %259 = vadd.xlane.f32.xlu0 %v256
        %v260 = vpop.xlane.xlu0 %259
        %v261 = vrot.slane %v260, 4
        %v262 = vadd.f32 %v260, %v261
        %v263 = vrot.slane %v262, 2
        %v264 = vadd.f32 %v262, %v263
        %v265 = vrot.slane %v264, 1
        %v266 = vadd.f32 %v264, %v265
        %s267 = vtos %v266
        %v268 = vstv %s267
        %269 = vadd.xlane.f32.xlu0 %v258
        %v270 = vpop.xlane.xlu0 %269
        %v271 = vrot.slane %v270, 4
        %v272 = vadd.f32 %v270, %v271
        %v273 = vrot.slane %v272, 2
        %v274 = vadd.f32 %v272, %v273
        %v275 = vrot.slane %v274, 1
        %v276 = vadd.f32 %v274, %v275
        %s277 = vtos %v276
        %v278 = vstv %s277
        %s279 = sld [smem:[#allocation2 + %s21]]
        %v280 = vstv %s279
        %v281 = vmul.f32 %v268, %v280
        %v282 = vmul.f32 %v278, %v280
        %v283 = vmul.f32 %v281, %v281
        %v284 = vsub.f32 %v282, %v283
        %v285 = vmax.f32 %v284, 0.0
        %v286 = vadd.f32 %v285, 1e-05
        %v287 = vrsqrt.pop %v286
        %v288 = vmul.f32 %v287, %v286
        %v289 = vmul.f32 %v288, %v287
        %v290 = vmul.f32 0.5, %v289
        %v291 = vsub.f32 1.5, %v290
        %v292 = vmul.f32 %v287, %v291
        %vm293 = vweird.f32 %v286
        %vm294 = vweird.f32 %v287
        %vm295 = vmor %vm293, %vm294
        %v296 = vsel %vm295, %v287, %v292
        %s297 = sld [smem:[#allocation4 + %s21]]
        %v298 = vstv %s297
        %v299 = vmul.f32 %v298, %v296
        %s300 = sld [smem:[#allocation6 + %s21]]
        %v301 = vmul.f32 %v281, %v299
        %v302 = vstv %s300
        %v303 = vsub.f32 %v302, %v301
        %v304 = vmul.f32 %v255, %v299
        %v305 = vadd.f32 %v304, %v303
        %306 = vst [vmem:[%s254] sm:$0xff] %v305
        %p307 = scmp.lt.s32.totalorder %s21, 5
        %s308 = scalar_select %p307, %s21, 5
        %s309 = smul.addr %s308, 8
        %s310 = scalar_lea.vmem %s4, %s309
        // Predicated region
        $region49: #{forward.1} parent=35 // pred_check
          %p311 = pneg %p138
        $region50: #{forward.1} parent=35 // pred_check_branch
          %313 = sbr.rel (%p311) target = $region52
        $region51: #{forward.1} parent=35 // pred_region
          _
        $region52: #{forward.1} parent=35 // pred_fallthru
          _
      $region36: #{forward.1} parent=5 // pred_fallthru
        _
      %p314 = scmp.le.s32.totalorder 2, %s12
      // Predicated region
      $region53: #{forward.1} parent=5 // pred_check
        %p315 = pneg %p314
      $region54: #{forward.1} parent=5 // pred_check_branch
        %317 = sbr.rel (%p315) target = $region56
      $region55: #{forward.1} parent=5 // pred_region
        %s318 = ssub.s32 %s12, 2
        // Predicated region
        $region57: #{forward.1} parent=55 // pred_check
          %p319 = pneg %p144
        $region58: #{forward.1} parent=55 // pred_check_branch
          %321 = sbr.rel (%p319) target = $region60
        $region59: #{forward.1} parent=55 // pred_region
          %p322 = scmp.lt.s32.totalorder %s23, 5
          %s323 = scalar_select %p322, %s23, 5
          %s324 = smul.addr %s323, 8
          %s325 = scalar_lea.vmem %s4, %s324
        $region60: #{forward.1} parent=55 // pred_fallthru
          _
      $region56: #{forward.1} parent=5 // pred_fallthru
        _
    $region6: #{forward.1} parent=1 // loop_footer
      %s16 = sadd.s32 1, %s12
    $region7: #{forward.1} parent=1 // loop_footer_branch
      %11 = sbr.rel target = $region3
    $region8: #{forward.1} parent=1 // loop_exit
      _
    %326 = vsyncpa [#allocation3], 1
    %s327 = scalar_lea.sflag [#allocation3], 1
    %328 = vsyncpa %s327, 1
    %329 = vsyncpa [#allocation5], 1

</llo_original>
